<compile_context>
chip_gen: v7x
topology: tpu7x:2x2x1
jax: 0.10.0
libtpu: 0.0.40
codegen_flags: <defaults>
</compile_context>

<pallas_src>
from functools import lru_cache

import numpy as np

import jax
import jax.numpy as jnp
from jax.experimental import pallas as pl
from jax.experimental.pallas import tpu as pltpu

_VMEM_LIMIT = 48 * 1024 * 1024  # < v7x 64 MiB physical; > default scoped limits


# ---------------------------------------------------------------------------
# Kernel 1: AvgPool2d(8, stride=8, padding=(4,2), count_include_pad=True)
# as a matmul against a static 0/1 pooling matrix pre-scaled by 1/64.
#   input block  (1, c_tile, H*W)   (NCHW, spatial flattened -- free reshape)
#   output block (1, c_tile, Hp*Wp)
# ---------------------------------------------------------------------------
def _pool_kernel(x_ref, m_ref, o_ref):
    o_ref[0] = jnp.dot(
        x_ref[0], m_ref[...], preferred_element_type=jnp.float32
    ).astype(o_ref.dtype)


@lru_cache(maxsize=None)
def _pool_matrix(h, w):
    """M[r*w + col, ph*wp + pw] = 1/64 iff (r, col) lies inside window (ph, pw).

    Out-of-image (padded) positions contribute no 1s; dividing by the full 64
    reproduces count_include_pad=True.  Cached per (H, W): built once, reused.
    """
    hp = h // 8 + 1           # floor((H + 2*4 - 8)/8) + 1
    wp = (w - 4) // 8 + 1     # floor((W + 2*2 - 8)/8) + 1
    m = np.zeros((h * w, hp * wp), np.float32)
    for ph in range(hp):
        hs, he = max(0, ph * 8 - 4), min(h, ph * 8 + 4)
        for pw_ in range(wp):
            ws, we = max(0, pw_ * 8 - 2), min(w, pw_ * 8 + 6)
            for r in range(hs, he):
                m[r * w + ws: r * w + we, ph * wp + pw_] = 1.0
    return jnp.asarray(m * (1.0 / 64.0))


def _pick_c_tile(c, cap):
    """Channel tile <= cap.  Prefer an exact divisor (multiple of 8); else a
    multiple-of-8 cap with a ragged last block (handled by the cdiv grid), so
    VMEM usage can never exceed the cap for unusual channel counts."""
    if c <= cap:
        return c
    for t in range(cap, 7, -8):
        if c % t == 0:
            return t
    return (cap // 8) * 8


def avg_pool_8x8(x_nchw, *, c_tile_cap=1024):
    """8x8/stride-8 average pool, padding (4,2), floor mode, count_include_pad.

    Returns (N, C, Hp*Wp) in NCHW flatten order so .reshape(N, C*Hp*Wp)
    matches PyTorch's x.view(-1, C*Hp*Wp).
    """
    n, c, h, w = x_nchw.shape
    hp = h // 8 + 1
    wp = (w - 4) // 8 + 1
    hw, p = h * w, hp * wp

    m = _pool_matrix(h, w)
    c_tile = _pick_c_tile(c, c_tile_cap)
    xr = x_nchw.reshape(n, c, hw)   # contiguous -> free, no HBM transpose pass

    return pl.pallas_call(
        _pool_kernel,
        out_shape=jax.ShapeDtypeStruct((n, c, p), x_nchw.dtype),
        grid_spec=pltpu.PrefetchScalarGridSpec(
            num_scalar_prefetch=0,
            grid=(n, pl.cdiv(c, c_tile)),
            in_specs=[
                pl.BlockSpec((1, c_tile, hw), lambda i, j: (i, j, 0)),
                # grid-invariant pooling matrix (not re-DMAed across steps)
                pl.BlockSpec((hw, p), lambda i, j: (0, 0)),
            ],
            out_specs=pl.BlockSpec((1, c_tile, p), lambda i, j: (i, j, 0)),
        ),
        compiler_params=pltpu.CompilerParams(
            dimension_semantics=("parallel", "parallel"),
            vmem_limit_bytes=_VMEM_LIMIT,
        ),
    )(xr, m)


# ---------------------------------------------------------------------------
# Kernel 2: fused Linear + ReLU + 1x1 conv (partial, per F-half).
# Grid = (nf, K/tk): the outer "parallel" axis splits the F features (and the
# wc reduction rows) across TensorCores; the inner "arbitrary" axis is the
# Linear K reduction with an f32 VMEM accumulator.  Each F-half emits its
# partial contribution to the 1x1 conv; partials + conv bias + the 1x1 ->
# (33,45) bilinear "upsample" (a pure broadcast) are applied in the wrapper.
# ---------------------------------------------------------------------------
def _fc_kernel(x_ref, w1_ref, b1_ref, wc_ref, o_ref, acc_ref):
    kk = pl.program_id(1)

    @pl.when(kk == 0)
    def _():
        acc_ref[...] = jnp.zeros_like(acc_ref)

    acc_ref[...] += jnp.dot(x_ref[...], w1_ref[...],
                            preferred_element_type=jnp.float32)

    @pl.when(kk == pl.num_programs(1) - 1)
    def _():
        h = jnp.maximum(acc_ref[...] + b1_ref[...], 0.0)       # Linear + ReLU (F-half)
        y = jnp.dot(h.astype(wc_ref.dtype), wc_ref[...],       # partial 1x1 conv
                    preferred_element_type=jnp.float32)
        o_ref[...] = y[None, :, :].astype(o_ref.dtype)


def _select_tk(k, itemsize, tf, target_tile_bytes):
    """Largest tk that (a) is a multiple of 128, (b) divides the 128-padded K
    (so at production size no jnp.pad copy of w1 is ever made), and (c) keeps
    one w1 tile (tk * tf * itemsize) within the byte budget.  Same policy on
    v5e / v6e / v7x: the budget (~8 MiB, double-buffered ~16 MiB) fits v7x's
    64 MiB per-core VMEM; v5e/v6e have 128 MiB so never shrink below it."""
    kpad = -(-k // 128) * 128
    units = kpad // 128
    max_units = max(1, target_tile_bytes // (128 * tf * itemsize))
    best = 1
    for d in range(1, units + 1):
        if units % d == 0 and d <= max_units:
            best = d
    return kpad, best * 128


def prepare_head_params(w1, b1, wc, bc, *, weight_dtype=jnp.bfloat16,
                        target_tile_bytes=8 * 1024 * 1024):
    """One-time offline weight preparation for the head kernel.

    - casts matmul weights to `weight_dtype` (bf16 default; f32 accumulation),
    - always splits F into two lane-aligned halves when F >= 256 (pads F with
      zero features if needed) so both v7x TensorCores stay busy,
    - pads K to a multiple of 128 (only needed off production size) and picks
      tk as a divisor of the padded K,
    - pre-splits w1 into nf contiguous (K, F/nf) slabs -> fully linear DMA.
    """
    k, f_in = w1.shape
    f_out = wc.shape[1]
    assert wc.shape[0] == f_in and b1.shape[0] == f_in and bc.shape[0] == f_out

    wdt = w1.dtype if weight_dtype is None else jnp.dtype(weight_dtype)
    nf = 2 if f_in >= 256 else 1
    fpad = -(-f_in // (128 * nf)) * (128 * nf)
    tf = fpad // nf
    kpad, tk = _select_tk(k, jnp.dtype(wdt).itemsize, tf, target_tile_bytes)

    # Zero padding of features/K is exact: relu(0 + 0) = 0 and zero wc rows.
    w1p = jnp.zeros((kpad, fpad), w1.dtype).at[:k, :f_in].set(w1)
    b1p = jnp.zeros((fpad,), jnp.float32).at[:f_in].set(b1.astype(jnp.float32))
    wcp = jnp.zeros((fpad, f_out), wc.dtype).at[:f_in, :].set(wc)

    w1s = w1p.reshape(kpad, nf, tf).transpose(1, 0, 2).astype(wdt)  # (nf, K, tf)

    return {
        "w1": w1s,                                  # (nf, kpad, tf), weight_dtype
        "b1": b1p.reshape(1, fpad),                 # f32 (added to f32 accumulator)
        "wc": wcp.astype(wdt),                      # (fpad, f_out)
        "bc": bc.reshape(1, f_out).astype(jnp.float32),
        "k": k, "kpad": kpad, "tk": tk, "nf": nf, "tf": tf, "f_out": f_out,
        "dtype": wdt,
    }


def encoder_head(x3, hp):
    """relu(x3 @ w1 + b1) @ wc + bc  ->  (N, F_out) in f32."""
    n = x3.shape[0]
    k, kpad, tk = hp["k"], hp["kpad"], hp["tk"]
    nf, tf, f_out = hp["nf"], hp["tf"], hp["f_out"]

    x3 = x3.astype(hp["dtype"])          # activations are tiny (N x K)
    if kpad != k:
        x3 = jnp.pad(x3, ((0, 0), (0, kpad - k)))

    partial = pl.pallas_call(
        _fc_kernel,
        out_shape=jax.ShapeDtypeStruct((nf, n, f_out), jnp.float32),
        grid_spec=pltpu.PrefetchScalarGridSpec(
            num_scalar_prefetch=0,
            grid=(nf, kpad // tk),
            in_specs=[
                pl.BlockSpec((n, tk), lambda fi, kk: (0, kk)),        # act K-tile
                pl.BlockSpec((None, tk, tf), lambda fi, kk: (fi, kk, 0)),  # w1 slab tile
                pl.BlockSpec((1, tf), lambda fi, kk: (0, fi)),        # Linear bias half
                pl.BlockSpec((tf, f_out), lambda fi, kk: (fi, 0)),    # conv1x1 rows
            ],
            out_specs=pl.BlockSpec((1, n, f_out), lambda fi, kk: (fi, 0, 0)),
            scratch_shapes=[pltpu.VMEM((n, tf), jnp.float32)],
        ),
        compiler_params=pltpu.CompilerParams(
            dimension_semantics=("parallel", "arbitrary"),
            vmem_limit_bytes=_VMEM_LIMIT,
        ),
    )(x3, hp["w1"], hp["b1"], hp["wc"])

    return jnp.sum(partial, axis=0) + hp["bc"]       # (N, F_out), tiny


# ---------------------------------------------------------------------------
# Full forward.  Wrapper ops are free reshapes / tiny tensors; the
# UpsamplingBilinear2d(size) from a 1x1 map (align_corners=True) is exactly a
# broadcast and is left to XLA on the small (N, F) head output.
# ---------------------------------------------------------------------------
def full_image_encoder(x_nchw, head_params, out_hw=(33, 45)):
    n = x_nchw.shape[0]
    pooled = avg_pool_8x8(x_nchw)                    # (N, C, Hp*Wp), NCHW order
    x3 = pooled.reshape(n, -1)                       # matches x2.view(-1, C*Hp*Wp)
    # Dropout2d(p=0.5) is identity at inference time.
    # TODO(synk): training-mode channel dropout (stateful RNG masking) not implemented.
    y = encoder_head(x3, head_params)
    ho, wo = out_hw
    return jnp.broadcast_to(y[:, :, None, None], (n, y.shape[1], ho, wo))


if __name__ == "__main__":
    # Small, structure-preserving config.
    # (Full-size module: C=2048, pooled 6x5 -> K=61440, F=512, output 33x45;
    #  there tk = 15360 (bf16) / 7680 (f32) divides K exactly -> no w1 pad.)
    N, C, H, W = 2, 32, 20, 20
    F = 256                      # exercises the 2-way lane-aligned F split
    OUT_HW = (33, 45)
    HP = H // 8 + 1              # 3
    WP = (W - 4) // 8 + 1        # 3
    K = C * HP * WP              # 288

    key = jax.random.PRNGKey(0)
    kx, k1, k2 = jax.random.split(key, 3)
    x = jax.random.normal(kx, (N, C, H, W), jnp.float32)

    std1 = (2.0 / (K + F)) ** 0.5
    stdc = (2.0 / (F + F)) ** 0.5
    w1 = std1 * jax.random.normal(k1, (K, F), jnp.float32)   # Linear.weight.T
    b1 = jnp.zeros((F,), jnp.float32)
    wc = stdc * jax.random.normal(k2, (F, F), jnp.float32)   # Conv1x1 (in, out)
    bc = jnp.zeros((F,), jnp.float32)

    # Pure-JAX reference.
    xp = jnp.pad(x, ((0, 0), (0, 0), (4, 4), (2, 2)))[:, :, :HP * 8, :WP * 8]
    pooled_ref = xp.reshape(N, C, HP, 8, WP, 8).mean(axis=(3, 5))
    x3_ref = pooled_ref.reshape(N, K)
    h_ref = jnp.maximum(x3_ref @ w1 + b1, 0.0)
    y_ref = h_ref @ wc + bc
    ref = jnp.broadcast_to(y_ref[:, :, None, None], (N, F) + OUT_HW)

    # f32 weight path: exact parity with the PyTorch module.
    p32 = prepare_head_params(w1, b1, wc, bc, weight_dtype=jnp.float32)
    out32 = jax.block_until_ready(full_image_encoder(x, p32, OUT_HW))
    assert out32.shape == (N, F) + OUT_HW, out32.shape
    err32 = float(jnp.max(jnp.abs(out32 - ref)))
    assert jnp.allclose(out32, ref, atol=2e-4, rtol=2e-4), err32

    # bf16 weight path (default, byte-optimal head): looser tolerance.
    pbf = prepare_head_params(w1, b1, wc, bc)   # weight_dtype=bf16 default
    outbf = jax.block_until_ready(full_image_encoder(x, pbf, OUT_HW))
    assert outbf.shape == (N, F) + OUT_HW, outbf.shape
    errbf = float(jnp.max(jnp.abs(outbf - ref)))
    assert jnp.allclose(outbf, ref, atol=3e-2, rtol=3e-2), errbf

    print("KERNEL_OK")
</pallas_src>

<mosaic_0001>
module attributes {stable_mosaic.version = 11 : i64} {
  func.func @_pool_kernel(%arg0: i32, %arg1: i32, %arg2: memref<1x32x400xf32, #tpu.memory_space<vmem>>, %arg3: memref<400x9xf32, #tpu.memory_space<vmem>>, %arg4: memref<1x32x9xf32, #tpu.memory_space<vmem>>) attributes {dimension_semantics = [#tpu.dimension_semantics<parallel>, #tpu.dimension_semantics<parallel>], iteration_bounds = array<i64: 2, 1>, scalar_prefetch = 0 : i64, scratch_operands = 0 : i64, tpu.core_type = #tpu.core_type<tc>, window_params = [{transform_indices = @transform_0, window_bounds = array<i64: 1, 32, 400>}, {pipeline_mode = #tpu.pipeline_mode<synchronous>, transform_indices = @transform_1, window_bounds = array<i64: 400, 9>}, {transform_indices = @transform_2, window_bounds = array<i64: 1, 32, 9>}]} {
    %c0 = arith.constant 0 : index
    %c0_0 = arith.constant 0 : index
    %c0_1 = arith.constant 0 : index
    %0 = vector.load %arg2[%c0, %c0_0, %c0_1] : memref<1x32x400xf32, #tpu.memory_space<vmem>>, vector<1x32x400xf32>
    %1 = vector.shape_cast %0 : vector<1x32x400xf32> to vector<32x400xf32>
    %c0_2 = arith.constant 0 : index
    %c0_3 = arith.constant 0 : index
    %2 = vector.load %arg3[%c0_2, %c0_3] : memref<400x9xf32, #tpu.memory_space<vmem>>, vector<400x9xf32>
    %cst = arith.constant dense<0.000000e+00> : vector<32x9xf32>
    %3 = tpu.matmul %1, %2, %cst {dimension_numbers = #tpu.dot_dimension_numbers<[1], [0], [0], [1], [0, 0, 1, 1], [], []>} : vector<32x400xf32>, vector<400x9xf32>, vector<32x9xf32> -> vector<32x9xf32>
    %c0_4 = arith.constant 0 : index
    %c0_5 = arith.constant 0 : index
    %c0_6 = arith.constant 0 : index
    %4 = vector.load %arg4[%c0_4, %c0_5, %c0_6] : memref<1x32x9xf32, #tpu.memory_space<vmem>>, vector<1x32x9xf32>
    %5 = vector.shape_cast %4 : vector<1x32x9xf32> to vector<32x9xf32>
    %6 = vector.shape_cast %3 : vector<32x9xf32> to vector<1x32x9xf32>
    tpu.vector_store %arg4[%c0_4, %c0_5, %c0_6], %6 {strides = array<i32>} : memref<1x32x9xf32, #tpu.memory_space<vmem>>, vector<1x32x9xf32>,
    return
  }
  func.func @transform_0(%arg0: i32, %arg1: i32) -> (i32, i32, i32) {
    %c0_i32 = arith.constant 0 : i32
    %c0_i32_0 = arith.constant 0 : i32
    return %arg0, %arg1, %c0_i32 : i32, i32, i32
  }
  func.func @transform_1(%arg0: i32, %arg1: i32) -> (i32, i32) {
    %c0_i32 = arith.constant 0 : i32
    %c0_i32_0 = arith.constant 0 : i32
    %c0_i32_1 = arith.constant 0 : i32
    return %c0_i32, %c0_i32_0 : i32, i32
  }
  func.func @transform_2(%arg0: i32, %arg1: i32) -> (i32, i32, i32) {
    %c0_i32 = arith.constant 0 : i32
    %c0_i32_0 = arith.constant 0 : i32
    return %arg0, %arg1, %c0_i32 : i32, i32, i32
  }
}

</mosaic_0001>

<llo_original>
// kernel: tpu_custom_call.1
$region0: #{tpu_custom_call.1}
  #allocation0 [shape = 'u32[]', space=smem, size = 0x4, offset = 0x4, fixed_abs, tag = 'smem constant byte address 0x4 - core index']
  #allocation1 [shape = 'u32[144,128]{1,0:T(1,128)}', space=vmem, size = 0x12000, scoped, tag = 'internal scratch']
  %s0 = inlined_call_operand.vmem [shape: f32[2,32,400], index: 0, kind: input, shape index: {}]
  %s1 = inlined_call_operand.vmem [shape: f32[400,9], index: 1, kind: input, shape index: {}]
  %s2 = inlined_call_operand.vmem [shape: f32[2,32,9], index: 2, kind: output, shape index: {}]
  %s3 = sld [smem:[#allocation0]]
  $region41: #{tpu_custom_call.1} parent=0
    _
  %s5 = ssub.s32 1, %s3
  %s6 = scalar_select 0, %s5, %s3
  loop: start=0, step=1, limit=4
  $region2: #{tpu_custom_call.1} parent=0 // loop_pre_header
    _
  $region3: #{tpu_custom_call.1} parent=0 // loop_header
    %s8 = sphi 0, %s12
    %p9 = scmp.ge.s32.totalorder %s8, 4
    %s15 = sphi 0, %s27
    %s16 = sphi 0, %s23
    %s17 = sphi 0, %s15
    %s18 = sphi 0, %s16
    %s19 = sphi 0, %s17
    %s20 = sphi 0, %s18
    %s32 = sphi 0, %s34
    %s35 = sphi 0, %s32
    %s36 = sphi 0, %s35
    %s52 = sphi 0, %s36
    %s56 = sphi 0, %s56
    %s58 = sphi 0, %s56
    %s59 = sphi 0, %s58
    %s73 = sphi 0, %s59
    %s81 = sphi 0, %s83
    %s84 = sphi 0, %s81
    %s85 = sphi 0, %s84
    %s101 = sphi 0, %s85
  $region4: #{tpu_custom_call.1} parent=0 // loop_header_branch
    %11 = sbr.rel (%p9) target = $region8
  $region5: #{tpu_custom_call.1} parent=0 // loop_body
    %s13 = ssub.s32 %s8, 1
    %s14 = ssub.s32 %s8, 2
    %s21 = sadd.s32 1, %s16
    %p22 = scmp.ge.s32.totalorder %s21, 1
    %s23 = scalar_select %p22, 0, %s21
    %s24 = sadd.s32 1, %s15
    %s25 = scalar_select %p22, %s24, %s15
    %p26 = scmp.ge.s32.totalorder %s25, 2
    %s27 = scalar_select %p26, 0, %s25
    %s28 = ssub.s32 %s15, %s27
    %s29 = ssub.s32 %s16, %s23
    %s30 = sor.u32 %s28, %s29
    %p31 = scmp.eq.s32.totalorder %s30, 0
    %s33 = sadd.s32 %s32, 1
    %s34 = scalar_select %p31, %s32, %s33
    %p37 = pneg %p31
    %p38 = scmp.eq.s32.totalorder %s8, 1
    %p39 = por %p37, %p38
    %p40 = scmp.ne.s32.totalorder %s32, %s35
    %p41 = scmp.eq.s32.totalorder %s8, 0
    %p42 = por %p40, %p41
    %p43 = scmp.ne.s32.totalorder %s32, %s35
    %p44 = scmp.eq.s32.totalorder %s13, 1
    %p45 = por %p43, %p44
    %p46 = scmp.ne.s32.totalorder %s35, %s36
    %p47 = scmp.eq.s32.totalorder %s13, 0
    %p48 = por %p46, %p47
    %p49 = scmp.ne.s32.totalorder %s35, %s36
    %p50 = scmp.eq.s32.totalorder %s14, 1
    %p51 = por %p49, %p50
    %p53 = scmp.ne.s32.totalorder %s36, %s52
    %p54 = scmp.eq.s32.totalorder %s14, 0
    %p55 = por %p53, %p54
    %s57 = sadd.s32 %s56, 1
    %p60 = scmp.eq.s32.totalorder %s8, 1
    %p61 = scmp.ne.s32.totalorder %s56, %s58
    %p62 = scmp.eq.s32.totalorder %s8, 0
    %p63 = por %p61, %p62
    %p64 = scmp.ne.s32.totalorder %s56, %s58
    %p65 = scmp.eq.s32.totalorder %s13, 1
    %p66 = por %p64, %p65
    %p67 = scmp.ne.s32.totalorder %s58, %s59
    %p68 = scmp.eq.s32.totalorder %s13, 0
    %p69 = por %p67, %p68
    %p70 = scmp.ne.s32.totalorder %s58, %s59
    %p71 = scmp.eq.s32.totalorder %s14, 1
    %p72 = por %p70, %p71
    %p74 = scmp.ne.s32.totalorder %s59, %s73
    %p75 = scmp.eq.s32.totalorder %s14, 0
    %p76 = por %p74, %p75
    %s77 = ssub.s32 %s15, %s27
    %s78 = ssub.s32 %s16, %s23
    %s79 = sor.u32 %s77, %s78
    %p80 = scmp.eq.s32.totalorder %s79, 0
    %s82 = sadd.s32 %s81, 1
    %s83 = scalar_select %p80, %s81, %s82
    %p86 = pneg %p80
    %p87 = scmp.eq.s32.totalorder %s8, 1
    %p88 = por %p86, %p87
    %p89 = scmp.ne.s32.totalorder %s81, %s84
    %p90 = scmp.eq.s32.totalorder %s8, 0
    %p91 = por %p89, %p90
    %p92 = scmp.ne.s32.totalorder %s81, %s84
    %p93 = scmp.eq.s32.totalorder %s13, 1
    %p94 = por %p92, %p93
    %p95 = scmp.ne.s32.totalorder %s84, %s85
    %p96 = scmp.eq.s32.totalorder %s13, 0
    %p97 = por %p95, %p96
    %p98 = scmp.ne.s32.totalorder %s84, %s85
    %p99 = scmp.eq.s32.totalorder %s14, 1
    %p100 = por %p98, %p99
    %p102 = scmp.ne.s32.totalorder %s85, %s101
    %p103 = scmp.eq.s32.totalorder %s14, 0
    %p104 = por %p102, %p103
    %p105 = scmp.le.s32.totalorder 1, %s8
    %p106 = scmp.lt.s32.totalorder %s8, 3
    %p107 = pnand %p105, %p106
    %p108 = pneg %p107
    // Predicated region
    $region9: #{tpu_custom_call.1} parent=5 // pred_check
      _
    $region10: #{tpu_custom_call.1} parent=5 // pred_check_branch
      %110 = sbr.rel (%p107) target = $region12
    $region11: #{tpu_custom_call.1} parent=5 // pred_region
      %s111 = ssub.s32 %s8, 1
      // Predicated region
      $region13: #{tpu_custom_call.1} parent=11 // pred_check
        %p112 = pneg %p69
      $region14: #{tpu_custom_call.1} parent=11 // pred_check_branch
        %114 = sbr.rel (%p112) target = $region16
      $region15: #{tpu_custom_call.1} parent=11 // pred_region
        _
      $region16: #{tpu_custom_call.1} parent=11 // pred_fallthru
        _
    $region12: #{tpu_custom_call.1} parent=5 // pred_fallthru
      _
    %p115 = scmp.lt.s32.totalorder %s8, 2
    // Predicated region
    $region17: #{tpu_custom_call.1} parent=5 // pred_check
      %p116 = pneg %p115
    $region18: #{tpu_custom_call.1} parent=5 // pred_check_branch
      %118 = sbr.rel (%p116) target = $region20
    $region19: #{tpu_custom_call.1} parent=5 // pred_region
      // Predicated region
      $region21: #{tpu_custom_call.1} parent=19 // pred_check
        %p119 = pneg %p42
      $region22: #{tpu_custom_call.1} parent=19 // pred_check_branch
        %121 = sbr.rel (%p119) target = $region24
      $region23: #{tpu_custom_call.1} parent=19 // pred_region
        %s122 = smul.u32 4, %s16
        %p123 = scmp.lt.s32.totalorder %s15, 1
        %s124 = scalar_select %p123, %s15, 1
        %p125 = scmp.lt.s32.totalorder %s122, 3
        %s126 = scalar_select %p125, %s122, 3
        %s127 = smul.addr %s126, 4
        %s128 = smul.addr %s124, 16
        %s129 = sadd.s32 %s127, %s128
        %s130 = smul.addr %s129, 8
        %s131 = scalar_lea.vmem %s0, %s130
        %s132 = smul.u32 4, %s16
      $region24: #{tpu_custom_call.1} parent=19 // pred_fallthru
        _
    $region20: #{tpu_custom_call.1} parent=5 // pred_fallthru
      _
    %p133 = scmp.le.s32.totalorder 1, %s8
    %p134 = scmp.lt.s32.totalorder %s8, 3
    %p135 = pnand %p133, %p134
    %p136 = pneg %p135
    // Predicated region
    $region25: #{tpu_custom_call.1} parent=5 // pred_check
      _
    $region26: #{tpu_custom_call.1} parent=5 // pred_check_branch
      %138 = sbr.rel (%p135) target = $region28
    $region27: #{tpu_custom_call.1} parent=5 // pred_region
      %s139 = ssub.s32 %s8, 1
      %s140 = smul.u32 4, %s18
      %p141 = scmp.lt.s32.totalorder %s17, 1
      %s142 = scalar_select %p141, %s17, 1
      %p143 = scmp.lt.s32.totalorder %s140, 3
      %s144 = scalar_select %p143, %s140, 3
      %s145 = smul.addr %s144, 4
      %s146 = smul.addr %s142, 16
      %s147 = sadd.s32 %s145, %s146
      %s148 = smul.addr %s147, 8
      %s149 = scalar_lea.vmem %s0, %s148
      %p150 = pneg %p48
      %p151 = pneg %p45
      %p152 = pneg %p69
      %p153 = pneg %p66
      %p154 = pneg %p97
      %p155 = pneg %p94
      %s156 = smul.u32 4, %s18
      %p157 = scmp.lt.s32.totalorder %s17, 1
      %s158 = scalar_select %p157, %s17, 1
      %p159 = scmp.lt.s32.totalorder %s156, 3
      %s160 = scalar_select %p159, %s156, 3
      %s161 = smul.addr %s158, 4
      %s162 = sadd.s32 %s160, %s161
      %s163 = smul.addr %s162, 8
      %s164 = scalar_lea.vmem %s2, %s163
      %s165 = smul.u32 4, %s18
      %p166 = scmp.lt.s32.totalorder %s17, 1
      %s167 = scalar_select %p166, %s17, 1
      %p168 = scmp.lt.s32.totalorder %s165, 3
      %s169 = scalar_select %p168, %s165, 3
      %s170 = smul.addr %s169, 4
      %s171 = smul.addr %s167, 16
      %s172 = sadd.s32 %s170, %s171
      %s173 = smul.addr %s172, 8
      %s174 = scalar_lea.vmem %s0, %s173
      %s175 = smul.u32 4, %s18
      %s176 = smul.u32 4, %s18
      %p177 = scmp.lt.s32.totalorder %s17, 1
      %s178 = scalar_select %p177, %s17, 1
      %p179 = scmp.lt.s32.totalorder %s176, 3
      %s180 = scalar_select %p179, %s176, 3
      %s181 = smul.addr %s178, 4
      %s182 = sadd.s32 %s180, %s181
      %s183 = smul.addr %s182, 8
      %s184 = scalar_lea.vmem %s2, %s183
      %s185 = smul.u32 4, %s18
      %v186 = vld [vmem:[%s174] sm:$0xff]
      %v187 = vld [vmem:[%s174 + $0x8] sm:$0xff]
      %v188 = vld [vmem:[%s174 + $0x10] sm:$0xff]
      %v189 = vld [vmem:[%s174 + $0x18] sm:$0xff]
      %v190 = vld [vmem:[%s174 + $0x20] sm:$0xff]
      %v191 = vld [vmem:[%s174 + $0x28] sm:$0xff]
      %v192 = vld [vmem:[%s174 + $0x30] sm:$0xff]
      %v193 = vld [vmem:[%s174 + $0x38] sm:$0xff]
      %v194 = vld [vmem:[%s174 + $0x40] sm:$0xff]
      %v195 = vld [vmem:[%s174 + $0x48] sm:$0xff]
      %v196 = vld [vmem:[%s174 + $0x50] sm:$0xff]
      %v197 = vld [vmem:[%s174 + $0x58] sm:$0xff]
      %v198 = vld [vmem:[%s174 + $0x60] sm:$0xff]
      %v199 = vld [vmem:[%s174 + $0x68] sm:$0xff]
      %v200 = vld [vmem:[%s174 + $0x70] sm:$0xff]
      %v201 = vld [vmem:[%s174 + $0x78] sm:$0xff]
      %v202 = vld [vmem:[%s1] sm:$0xff]
      %v203 = vld [vmem:[%s1 + $0x8] sm:$0xff]
      %v204 = vld [vmem:[%s1 + $0x10] sm:$0xff]
      %v205 = vld [vmem:[%s1 + $0x18] sm:$0xff]
      %v206 = vld [vmem:[%s1 + $0x20] sm:$0xff]
      %v207 = vld [vmem:[%s1 + $0x28] sm:$0xff]
      %v208 = vld [vmem:[%s1 + $0x30] sm:$0xff]
      %v209 = vld [vmem:[%s1 + $0x38] sm:$0xff]
      %v210 = vld [vmem:[%s1 + $0x40] sm:$0xff]
      %v211 = vld [vmem:[%s1 + $0x48] sm:$0xff]
      %v212 = vld [vmem:[%s1 + $0x50] sm:$0xff]
      %v213 = vld [vmem:[%s1 + $0x58] sm:$0xff]
      %v214 = vld [vmem:[%s1 + $0x60] sm:$0xff]
      %v215 = vld [vmem:[%s1 + $0x68] sm:$0xff]
      %v216 = vld [vmem:[%s1 + $0x70] sm:$0xff]
      %v217 = vld [vmem:[%s1 + $0x78] sm:$0xff]
      %v218 = vld [vmem:[%s1 + $0x80] sm:$0xff]
      %v219 = vld [vmem:[%s1 + $0x88] sm:$0xff]
      %v220 = vld [vmem:[%s1 + $0x90] sm:$0xff]
      %v221 = vld [vmem:[%s1 + $0x98] sm:$0xff]
      %v222 = vld [vmem:[%s1 + $0xa0] sm:$0xff]
      %v223 = vld [vmem:[%s1 + $0xa8] sm:$0xff]
      %v224 = vld [vmem:[%s1 + $0xb0] sm:$0xff]
      %v225 = vld [vmem:[%s1 + $0xb8] sm:$0xff]
      %v226 = vld [vmem:[%s1 + $0xc0] sm:$0xff]
      %v227 = vld [vmem:[%s1 + $0xc8] sm:$0xff]
      %v228 = vld [vmem:[%s1 + $0xd0] sm:$0xff]
      %v229 = vld [vmem:[%s1 + $0xd8] sm:$0xff]
      %v230 = vld [vmem:[%s1 + $0xe0] sm:$0xff]
      %v231 = vld [vmem:[%s1 + $0xe8] sm:$0xff]
      %v232 = vld [vmem:[%s1 + $0xf0] sm:$0xff]
      %v233 = vld [vmem:[%s1 + $0xf8] sm:$0xff]
      %v234 = vld [vmem:[%s1 + $0x100] sm:$0xff]
      %v235 = vld [vmem:[%s1 + $0x108] sm:$0xff]
      %v236 = vld [vmem:[%s1 + $0x110] sm:$0xff]
      %v237 = vld [vmem:[%s1 + $0x118] sm:$0xff]
      %v238 = vld [vmem:[%s1 + $0x120] sm:$0xff]
      %v239 = vld [vmem:[%s1 + $0x128] sm:$0xff]
      %v240 = vld [vmem:[%s1 + $0x130] sm:$0xff]
      %v241 = vld [vmem:[%s1 + $0x138] sm:$0xff]
      %v242 = vld [vmem:[%s1 + $0x140] sm:$0xff]
      %v243 = vld [vmem:[%s1 + $0x148] sm:$0xff]
      %v244 = vld [vmem:[%s1 + $0x150] sm:$0xff]
      %v245 = vld [vmem:[%s1 + $0x158] sm:$0xff]
      %v246 = vld [vmem:[%s1 + $0x160] sm:$0xff]
      %v247 = vld [vmem:[%s1 + $0x168] sm:$0xff]
      %v248 = vld [vmem:[%s1 + $0x170] sm:$0xff]
      %v249 = vld [vmem:[%s1 + $0x178] sm:$0xff]
      %v250 = vld [vmem:[%s1 + $0x180] sm:$0xff]
      %v251 = vld [vmem:[%s1 + $0x188] sm:$0xff]
      %vm252 = vcmask 130048
      %v254 = vsel %vm252, %v189, 0
      %v257 = vsel %vm252, %v193, 0
      %v260 = vsel %vm252, %v197, 0
      %v263 = vsel %vm252, %v201, 0
      %265 = vmatprep.subr.mxu0 0.0
      %266 = vmatpush1.msra.mxu0 %v202
      %267 = vmatprep.subr.mxu0 0.0
      %268 = vmatpush1.msra.mxu0 %v203
      %269 = vmatprep.subr.mxu0 0.0
      %270 = vmatpush1.msra.mxu0 %v204
      %271 = vmatprep.subr.mxu0 0.0
      %272 = vmatpush1.msra.mxu0 %v205
      %273 = vmatprep.subr.mxu0 0.0
      %274 = vmatpush1.msra.mxu0 %v206
      %275 = vmatprep.subr.mxu0 0.0
      %276 = vmatpush1.msra.mxu0 %v207
      %277 = vmatprep.subr.mxu0 0.0
      %278 = vmatpush1.msra.mxu0 %v208
      %279 = vmatprep.subr.mxu0 0.0
      %280 = vmatpush1.msra.mxu0 %v209
      %281 = vmatprep.subr.mxu0 0.0
      %282 = vmatpush1.msra.mxu0 %v210
      %283 = vmatprep.subr.mxu0 0.0
      %284 = vmatpush1.msra.mxu0 %v211
      %285 = vmatprep.subr.mxu0 0.0
      %286 = vmatpush1.msra.mxu0 %v212
      %287 = vmatprep.subr.mxu0 0.0
      %288 = vmatpush1.msra.mxu0 %v213
      %289 = vmatprep.subr.mxu0 0.0
      %290 = vmatpush1.msra.mxu0 %v214
      %291 = vmatprep.subr.mxu0 0.0
      %292 = vmatpush1.msra.mxu0 %v215
      %293 = vmatprep.subr.mxu0 0.0
      %294 = vmatpush1.msra.mxu0 %v216
      %295 = vmatprep.subr.mxu0 0.0
      %296 = vmatpush1.msra.mxu0 %v217
      %297 = vmatprep.subr.mxu0 0.0
      %298 = vmatpush1.msra.mxu0 %v218
      %299 = vmatprep.subr.mxu0 0.0
      %300 = vmatpush1.msra.mxu0 %v219
      %301 = vmatprep.subr.mxu0 0.0
      %302 = vmatpush1.msra.mxu0 %v220
      %303 = vmatprep.subr.mxu0 0.0
      %304 = vmatpush1.msra.mxu0 %v221
      %305 = vmatprep.subr.mxu0 0.0
      %306 = vmatpush1.msra.mxu0 %v222
      %307 = vmatprep.subr.mxu0 0.0
      %308 = vmatpush1.msra.mxu0 %v223
      %309 = vmatprep.subr.mxu0 0.0
      %310 = vmatpush1.msra.mxu0 %v224
      %311 = vmatprep.subr.mxu0 0.0
      %312 = vmatpush1.msra.mxu0 %v225
      %313 = vmatprep.subr.mxu0 0.0
      %314 = vmatpush1.msra.mxu0 %v226
      %315 = vmatprep.subr.mxu0 0.0
      %316 = vmatpush1.msra.mxu0 %v227
      %317 = vmatprep.subr.mxu0 0.0
      %318 = vmatpush1.msra.mxu0 %v228
      %319 = vmatprep.subr.mxu0 0.0
      %320 = vmatpush1.msra.mxu0 %v229
      %321 = vmatprep.subr.mxu0 0.0
      %322 = vmatpush1.msra.mxu0 %v230
      %323 = vmatprep.subr.mxu0 0.0
      %324 = vmatpush1.msra.mxu0 %v231
      %325 = vmatprep.subr.mxu0 0.0
      %326 = vmatpush1.msra.mxu0 %v232
      %327 = vmatprep.subr.mxu0 0.0
      %328 = vmatpush1.msra.mxu0 %v233
      %329 = vmatprep.mubr.f32.mxu0 %v187
      %330 = vmatmul.mubr.f32.gmra.mrb[0].mxu0 %v186
      %v331 = vpop.f32.mrb[0].mxu0
      %v332 = vadd.f32 0.0, %v331
      %v333 = vpop.f32.mrb[0].mxu0
      %334 = vmatprep.mubr.f32.mxu0 %v191
      %335 = vmatmul.mubr.f32.gmra.mrb[0].mxu0 %v190
      %v336 = vpop.f32.mrb[0].mxu0
      %v337 = vadd.f32 0.0, %v336
      %v338 = vpop.f32.mrb[0].mxu0
      %339 = vmatprep.mubr.f32.mxu0 %v195
      %340 = vmatmul.mubr.f32.gmra.mrb[0].mxu0 %v194
      %v341 = vpop.f32.mrb[0].mxu0
      %v342 = vadd.f32 0.0, %v341
      %v343 = vpop.f32.mrb[0].mxu0
      %344 = vmatprep.mubr.f32.mxu0 %v199
      %345 = vmatmul.mubr.f32.gmra.mrb[0].mxu0 %v198
      %v346 = vpop.f32.mrb[0].mxu0
      %v347 = vadd.f32 0.0, %v346
      %v348 = vpop.f32.mrb[0].mxu0
      %349 = vdwg.mxu0
      %350 = vmatprep.subr.mxu0 0.0
      %351 = vmatpush1.msra.mxu0 %v234
      %352 = vmatprep.subr.mxu0 0.0
      %353 = vmatpush1.msra.mxu0 %v235
      %354 = vmatprep.subr.mxu0 0.0
      %355 = vmatpush1.msra.mxu0 %v236
      %356 = vmatprep.subr.mxu0 0.0
      %357 = vmatpush1.msra.mxu0 %v237
      %358 = vmatprep.subr.mxu0 0.0
      %359 = vmatpush1.msra.mxu0 %v238
      %360 = vmatprep.subr.mxu0 0.0
      %361 = vmatpush1.msra.mxu0 %v239
      %362 = vmatprep.subr.mxu0 0.0
      %363 = vmatpush1.msra.mxu0 %v240
      %364 = vmatprep.subr.mxu0 0.0
      %365 = vmatpush1.msra.mxu0 %v241
      %366 = vmatprep.subr.mxu0 0.0
      %367 = vmatpush1.msra.mxu0 %v242
      %368 = vmatprep.subr.mxu0 0.0
      %369 = vmatpush1.msra.mxu0 %v243
      %370 = vmatprep.subr.mxu0 0.0
      %371 = vmatpush1.msra.mxu0 %v244
      %372 = vmatprep.subr.mxu0 0.0
      %373 = vmatpush1.msra.mxu0 %v245
      %374 = vmatprep.subr.mxu0 0.0
      %375 = vmatpush1.msra.mxu0 %v246
      %376 = vmatprep.subr.mxu0 0.0
      %377 = vmatpush1.msra.mxu0 %v247
      %378 = vmatprep.subr.mxu0 0.0
      %379 = vmatpush1.msra.mxu0 %v248
      %380 = vmatprep.subr.mxu0 0.0
      %381 = vmatpush1.msra.mxu0 %v249
      %382 = vmatprep.subr.mxu0 0.0
      %383 = vmatpush1.msra.mxu0 %v250
      %384 = vmatprep.subr.mxu0 0.0
      %385 = vmatpush1.msra.mxu0 %v251
      %386 = vmatprep.subr.mxu0 0.0
      %387 = vmatpush1.msra.mxu0 0.0
      %388 = vmatprep.subr.mxu0 0.0
      %389 = vmatpush1.msra.mxu0 0.0
      %390 = vmatprep.subr.mxu0 0.0
      %391 = vmatpush1.msra.mxu0 0.0
      %392 = vmatprep.subr.mxu0 0.0
      %393 = vmatpush1.msra.mxu0 0.0
      %394 = vmatprep.subr.mxu0 0.0
      %395 = vmatpush1.msra.mxu0 0.0
      %396 = vmatprep.subr.mxu0 0.0
      %397 = vmatpush1.msra.mxu0 0.0
      %398 = vmatprep.subr.mxu0 0.0
      %399 = vmatpush1.msra.mxu0 0.0
      %400 = vmatprep.subr.mxu0 0.0
      %401 = vmatpush1.msra.mxu0 0.0
      %402 = vmatprep.subr.mxu0 0.0
      %403 = vmatpush1.msra.mxu0 0.0
      %404 = vmatprep.subr.mxu0 0.0
      %405 = vmatpush1.msra.mxu0 0.0
      %406 = vmatprep.subr.mxu0 0.0
      %407 = vmatpush1.msra.mxu0 0.0
      %408 = vmatprep.subr.mxu0 0.0
      %409 = vmatpush1.msra.mxu0 0.0
      %410 = vmatprep.subr.mxu0 0.0
      %411 = vmatpush1.msra.mxu0 0.0
      %412 = vmatprep.subr.mxu0 0.0
      %413 = vmatpush1.msra.mxu0 0.0
      %414 = vmatprep.mubr.f32.mxu0 %v254
      %415 = vmatmul.mubr.f32.gmra.mrb[0].mxu0 %v188
      %v416 = vpop.f32.mrb[0].mxu0
      %v417 = vadd.f32 %v332, %v416
      %v418 = vpop.f32.mrb[0].mxu0
      %419 = vmatprep.mubr.f32.mxu0 %v257
      %420 = vmatmul.mubr.f32.gmra.mrb[0].mxu0 %v192
      %v421 = vpop.f32.mrb[0].mxu0
      %v422 = vadd.f32 %v337, %v421
      %v423 = vpop.f32.mrb[0].mxu0
      %424 = vmatprep.mubr.f32.mxu0 %v260
      %425 = vmatmul.mubr.f32.gmra.mrb[0].mxu0 %v196
      %v426 = vpop.f32.mrb[0].mxu0
      %v427 = vadd.f32 %v342, %v426
      %v428 = vpop.f32.mrb[0].mxu0
      %429 = vmatprep.mubr.f32.mxu0 %v263
      %430 = vmatmul.mubr.f32.gmra.mrb[0].mxu0 %v200
      %v431 = vpop.f32.mrb[0].mxu0
      %v432 = vadd.f32 %v347, %v431
      %v433 = vpop.f32.mrb[0].mxu0
      %434 = vdwg.mxu0
      %vm435 = vcmask 72704
      %436 = vst.msk [vmem:[%s184] sm:$0xff] %vm435, %v417
      %437 = vst.msk [vmem:[%s184 + $0x8] sm:$0xff] %vm435, %v422
      %438 = vst.msk [vmem:[%s184 + $0x10] sm:$0xff] %vm435, %v427
      %439 = vst.msk [vmem:[%s184 + $0x18] sm:$0xff] %vm435, %v432
      %s440 = smul.u32 4, %s18
      %p441 = scmp.lt.s32.totalorder %s17, 1
      %s442 = scalar_select %p441, %s17, 1
      %p443 = scmp.lt.s32.totalorder %s440, 3
      %s444 = scalar_select %p443, %s440, 3
      %s445 = smul.addr %s442, 4
      %s446 = sadd.s32 %s444, %s445
      %s447 = smul.addr %s446, 8
      %s448 = scalar_lea.vmem %s2, %s447
      // Predicated region
      $region29: #{tpu_custom_call.1} parent=27 // pred_check
        %p449 = pneg %p94
      $region30: #{tpu_custom_call.1} parent=27 // pred_check_branch
        %451 = sbr.rel (%p449) target = $region32
      $region31: #{tpu_custom_call.1} parent=27 // pred_region
        %s452 = smul.u32 4, %s18
      $region32: #{tpu_custom_call.1} parent=27 // pred_fallthru
        _
    $region28: #{tpu_custom_call.1} parent=5 // pred_fallthru
      _
    %p453 = scmp.le.s32.totalorder 2, %s8
    // Predicated region
    $region33: #{tpu_custom_call.1} parent=5 // pred_check
      %p454 = pneg %p453
    $region34: #{tpu_custom_call.1} parent=5 // pred_check_branch
      %456 = sbr.rel (%p454) target = $region36
    $region35: #{tpu_custom_call.1} parent=5 // pred_region
      %s457 = ssub.s32 %s8, 2
      // Predicated region
      $region37: #{tpu_custom_call.1} parent=35 // pred_check
        %p458 = pneg %p100
      $region38: #{tpu_custom_call.1} parent=35 // pred_check_branch
        %460 = sbr.rel (%p458) target = $region40
      $region39: #{tpu_custom_call.1} parent=35 // pred_region
        %s461 = smul.u32 4, %s20
        %p462 = scmp.lt.s32.totalorder %s19, 1
        %s463 = scalar_select %p462, %s19, 1
        %p464 = scmp.lt.s32.totalorder %s461, 3
        %s465 = scalar_select %p464, %s461, 3
        %s466 = smul.addr %s463, 4
        %s467 = sadd.s32 %s465, %s466
        %s468 = smul.addr %s467, 8
        %s469 = scalar_lea.vmem %s2, %s468
      $region40: #{tpu_custom_call.1} parent=35 // pred_fallthru
        _
    $region36: #{tpu_custom_call.1} parent=5 // pred_fallthru
      _
  $region6: #{tpu_custom_call.1} parent=0 // loop_footer
    %s12 = sadd.s32 1, %s8
  $region7: #{tpu_custom_call.1} parent=0 // loop_footer_branch
    %7 = sbr.rel target = $region3
  $region8: #{tpu_custom_call.1} parent=0 // loop_exit
    _

</llo_original>
